<compile_context>
chip_gen: v7x
topology: tpu7x:2x2x1
jax: 0.10.0
libtpu: 0.0.40
codegen_flags: <defaults>
</compile_context>

<pallas_src>
import functools

import jax
import jax.numpy as jnp
from jax import lax
from jax.experimental import pallas as pl
from jax.experimental.pallas import tpu as pltpu


def _round_up(x, m):
    return (x + m - 1) // m * m


def _elem_loss_fn(loss_type):
    if loss_type == "mse":
        def f(a, b):
            d = a - b
            return d * d
    elif loss_type == "huber":  # torch.nn.HuberLoss default delta=1.0
        def f(a, b):
            d = jnp.abs(a - b)
            return jnp.where(d < 1.0, 0.5 * d * d, d - 0.5)
    else:
        raise NotImplementedError(loss_type)
    return f


def _duration_loss_kernel(dur_pred_ref, dur_gt_ref, ph2word_ref, out_ref, *,
                          offset, loss_type, w_chunk):
    """Grid = (batch blocks, word-id chunks), both "parallel".
    Word chunk g covers real word ids [g*w_chunk + 1, (g+1)*w_chunk].
    Each step writes one (1,1,1,4) block of UNnormalized partial sums:
      [p_sum, w_sum, s_sum, max(ph2word)]  (p/s/max only on chunk 0)."""
    g = pl.program_id(1)

    dur_pred = dur_pred_ref[...].astype(jnp.float32)          # [Bb, T]
    dur_gt = dur_gt_ref[...].astype(jnp.float32)              # [Bb, T] (.to(dtype))
    ph2word = ph2word_ref[...]                                 # [Bb, T] int32

    elem_loss = _elem_loss_fn(loss_type)

    def log_off(x):
        return jnp.log(x + offset)

    dur_pred_c = jnp.maximum(dur_pred, 0.0)                    # clamp(min=0.0)

    # ---- word-duration partial: scatter_add as an MXU matmul.
    base = g * w_chunk
    word_ids = (lax.broadcasted_iota(jnp.int32, (1, w_chunk, 1), dimension=1)
                + base + 1)                                    # skip pad word id 0
    mask_f = (ph2word[:, None, :] == word_ids).astype(jnp.float32)  # [Bb, Wc, T]
    vals = jnp.stack([dur_pred_c, dur_gt], axis=1)             # [Bb, 2, T] f32
    # contraction over T on both operands (q@k^T pattern); f32 acc for exactness
    wdur = jnp.einsum("bct,bwt->bcw", vals, mask_f,
                      preferred_element_type=jnp.float32)      # [Bb, 2, Wc]
    # Word ids beyond ph2word.max() match nothing -> both sums are 0 ->
    # elem_loss(log(offset), log(offset)) == 0, so padding the word axis never
    # perturbs the numerator; only the mean denominator (wrapper) needs the
    # true count (emitted in lane 3 below).
    w_sum = jnp.sum(elem_loss(log_off(wdur[:, 0, :]), log_off(wdur[:, 1, :])),
                    keepdims=True)                             # (1, 1)

    zero = jnp.zeros((1, 1), jnp.float32)
    out_ref[...] = jnp.concatenate([zero, w_sum, zero, zero],
                                   axis=-1).reshape(1, 1, 1, 4)

    # ---- phone / sentence partials + word count: only on the first word chunk.
    @pl.when(g == 0)
    def _():
        p_sum = jnp.sum(elem_loss(log_off(dur_pred), log_off(dur_gt)),
                        keepdims=True)                         # (1, 1)
        sdur_pred = jnp.sum(dur_pred_c, axis=1, keepdims=True)  # [Bb, 1]
        sdur_gt = jnp.sum(dur_gt, axis=1, keepdims=True)        # [Bb, 1]
        s_sum = jnp.sum(elem_loss(log_off(sdur_pred), log_off(sdur_gt)),
                        keepdims=True)                         # (1, 1)
        wmax = jnp.max(ph2word, keepdims=True).astype(jnp.float32)  # (1, 1)
        out_ref[...] = jnp.concatenate([p_sum, w_sum, s_sum, wmax],
                                       axis=-1).reshape(1, 1, 1, 4)


def _vmem_budget():
    """Generation-aware (budget for [Bb,Wc,T] intermediates, vmem_limit cap)."""
    try:
        cap = int(pltpu.get_tpu_info().vmem_capacity_bytes)
    except Exception:  # pragma: no cover - conservative fallback
        cap = 64 << 20
    if cap <= (64 << 20):           # v7x-class: 64 MiB physical per TC
        return 20 << 20, 40 << 20
    return 48 << 20, 100 << 20      # v5e / v6e: 128 MiB


def _pick_blocks(B, T, w_max, w_req, budget_bytes):
    """Batch block (multiple of 8 dividing B, else full B) and the largest
    multiple-of-8 word chunk whose live intermediates fit the budget."""
    Bb = 8 if (B > 8 and B % 8 == 0) else B
    wc = max(8, min(_round_up(w_req, 8), _round_up(w_max, 8)))

    def est(bb, w):
        # bool mask (counted as i32) + f32 mask [bb, w, T] + small [bb, T] temps.
        return 3 * bb * w * T * 4 + 10 * bb * T * 4

    while wc > 8 and est(Bb, wc) > budget_bytes:
        wc = _round_up(wc // 2, 8)
    return Bb, wc, est(Bb, wc)


def duration_loss(dur_pred, dur_gt, ph2word, *, offset=1.0, loss_type="mse",
                  lambda_pdur=0.6, lambda_wdur=0.3, lambda_sdur=0.1,
                  max_words=None, w_chunk=256):
    """Pallas TPU implementation of DurationLoss.forward. Returns a scalar.

    `max_words` is a STATIC upper bound on ph2word.max()+1 (word id 0 is
    padding and is dropped, matching the PyTorch `[:, 1:]`).  Pass a tight
    dataset-level constant to cut the O(B*W*T) word sweep; the default T+1 is
    always safe.  Fully jax.jit-compatible (no device->host sync)."""
    dur_pred = jnp.asarray(dur_pred)
    dur_gt = jnp.asarray(dur_gt)            # native dtype; kernel casts in VMEM
    ph2word = jnp.asarray(ph2word, jnp.int32)
    B, T = dur_pred.shape

    if max_words is None:
        max_words = T + 1
    w_max = max(int(max_words) - 1, 1)      # real word ids 1..w_max (padded)

    budget, limit_cap = _vmem_budget()
    Bb, wc, est = _pick_blocks(B, T, w_max, w_chunk, budget)
    grid_b = pl.cdiv(B, Bb)
    grid_w = pl.cdiv(w_max, wc)
    # v7x megacore: make sure there are >= 2 independent parallel steps when
    # possible (harmless single extra step on single-TC v5e/v6e).
    if grid_b * grid_w == 1 and w_max > 8:
        wc = _round_up(pl.cdiv(w_max, 2), 8)
        grid_w = pl.cdiv(w_max, wc)

    kernel = functools.partial(_duration_loss_kernel, offset=float(offset),
                               loss_type=loss_type, w_chunk=wc)

    part_shape = jax.ShapeDtypeStruct((grid_b, grid_w, 1, 4), jnp.float32)
    part_spec = pl.BlockSpec((1, 1, 1, 4), lambda b, g: (b, g, 0, 0))
    in_spec = pl.BlockSpec((Bb, T), lambda b, g: (b, 0))  # resident across W grid

    vmem_limit = int(min(max(2 * est + (8 << 20), 16 << 20), limit_cap))

    parts = pl.pallas_call(
        kernel,
        out_shape=part_shape,
        grid=(grid_b, grid_w),
        in_specs=[in_spec, in_spec, in_spec],
        out_specs=part_spec,
        compiler_params=pltpu.CompilerParams(
            dimension_semantics=("parallel", "parallel"),
            vmem_limit_bytes=vmem_limit,
        ),
    )(dur_pred, dur_gt, ph2word)

    # lane 3 of chunk-0 blocks carries per-batch-block max(ph2word); other
    # chunks wrote 0, so a plain max recovers the global word count.
    # Guard num_words == 0 (all-padding ph2word): the word term becomes 0
    # instead of PyTorch's NaN (mean over an empty tensor).
    num_real_words = jnp.maximum(jnp.max(parts[..., 3]), 1.0)

    p_loss = jnp.sum(parts[..., 0]) / float(B * T)
    w_loss = jnp.sum(parts[..., 1]) / (num_real_words * float(B))
    s_loss = jnp.sum(parts[..., 2]) / float(B)
    return lambda_pdur * p_loss + lambda_wdur * w_loss + lambda_sdur * s_loss


def _duration_loss_ref(dur_pred, dur_gt, ph2word, *, offset=1.0, loss_type="mse",
                       lambda_pdur=0.6, lambda_wdur=0.3, lambda_sdur=0.1):
    """Pure-JAX reference mirroring the PyTorch forward (host-side num_words)."""
    dur_pred = jnp.asarray(dur_pred, jnp.float32)
    dur_gt = jnp.asarray(dur_gt, jnp.float32)
    ph2word = jnp.asarray(ph2word, jnp.int32)
    B, T = dur_pred.shape
    W = int(jax.device_get(ph2word).max()) + 1

    def l2l(x):
        return jnp.log(x + offset)

    if loss_type == "mse":
        crit = lambda a, b: jnp.mean((a - b) ** 2)
    else:  # huber, delta=1.0
        def crit(a, b):
            d = jnp.abs(a - b)
            return jnp.mean(jnp.where(d < 1.0, 0.5 * d * d, d - 0.5))

    pdur = lambda_pdur * crit(l2l(dur_pred), l2l(dur_gt))
    pred_c = jnp.clip(dur_pred, 0.0, None)
    rows = jnp.arange(B)[:, None]
    wp = jnp.zeros((B, W), jnp.float32).at[rows, ph2word].add(pred_c)[:, 1:]
    wg = jnp.zeros((B, W), jnp.float32).at[rows, ph2word].add(dur_gt)[:, 1:]
    wdur = lambda_wdur * crit(l2l(wp), l2l(wg))
    sdur = lambda_sdur * crit(l2l(pred_c.sum(1)), l2l(dur_gt.sum(1)))
    return pdur + wdur + sdur


if __name__ == "__main__":
    key = jax.random.PRNGKey(0)
    k1, k2 = jax.random.split(key)

    B, T = 2, 16
    # predicted phone durations (positive floats)
    dur_pred = jax.random.uniform(k1, (B, T), jnp.float32, 0.1, 5.0)
    # ground-truth phone durations (integer frame counts; kernel casts)
    dur_gt = jax.random.randint(k2, (B, T), 1, 8).astype(jnp.int32)
    # phone -> word mapping; 0 = padding word (dropped in the loss)
    ph2word = jnp.array(
        [[1, 1, 1, 2, 2, 3, 3, 3, 4, 4, 4, 4, 0, 0, 0, 0],
         [1, 1, 2, 2, 2, 2, 3, 3, 3, 4, 4, 0, 0, 0, 0, 0]], dtype=jnp.int32)

    for lt in ("mse", "huber"):
        loss = jax.block_until_ready(
            duration_loss(dur_pred, dur_gt, ph2word, offset=1.0, loss_type=lt))
        ref = _duration_loss_ref(dur_pred, dur_gt, ph2word, offset=1.0, loss_type=lt)
        assert jnp.allclose(loss, ref, rtol=1e-5, atol=1e-5), (lt, loss, ref)

    # Tight static max_words (dataset-level bound) -- same result, less work.
    loss_tight = jax.block_until_ready(
        duration_loss(dur_pred, dur_gt, ph2word, offset=1.0, loss_type="mse",
                      max_words=8))
    ref = _duration_loss_ref(dur_pred, dur_gt, ph2word, offset=1.0, loss_type="mse")
    assert jnp.allclose(loss_tight, ref, rtol=1e-5, atol=1e-5), (loss_tight, ref)

    # The wrapper is fully jittable (no host-side ph2word.max() sync).
    jit_loss = jax.block_until_ready(
        jax.jit(functools.partial(duration_loss, offset=1.0, loss_type="mse"))(
            dur_pred, dur_gt, ph2word))
    assert jnp.allclose(jit_loss, ref, rtol=1e-5, atol=1e-5), (jit_loss, ref)

    print("KERNEL_OK")
</pallas_src>

<mosaic_0001>
module attributes {stable_mosaic.version = 11 : i64} {
  func.func @_duration_loss_kernel(%arg0: i32, %arg1: i32, %arg2: memref<2x16xf32, #tpu.memory_space<vmem>>, %arg3: memref<2x16xi32, #tpu.memory_space<vmem>>, %arg4: memref<2x16xi32, #tpu.memory_space<vmem>>, %arg5: memref<1x1x1x4xf32, #tpu.memory_space<vmem>>) attributes {dimension_semantics = [#tpu.dimension_semantics<parallel>, #tpu.dimension_semantics<parallel>], iteration_bounds = array<i64: 1, 2>, scalar_prefetch = 0 : i64, scratch_operands = 0 : i64, tpu.core_type = #tpu.core_type<tc>, window_params = [{transform_indices = @transform_0, window_bounds = array<i64: 2, 16>}, {transform_indices = @transform_1, window_bounds = array<i64: 2, 16>}, {transform_indices = @transform_2, window_bounds = array<i64: 2, 16>}, {transform_indices = @transform_3, window_bounds = array<i64: 1, 1, 1, 4>}]} {
    %c0 = arith.constant 0 : index
    %c0_0 = arith.constant 0 : index
    %0 = vector.load %arg2[%c0, %c0_0] : memref<2x16xf32, #tpu.memory_space<vmem>>, vector<2x16xf32>
    %c0_1 = arith.constant 0 : index
    %c0_2 = arith.constant 0 : index
    %1 = vector.load %arg3[%c0_1, %c0_2] : memref<2x16xi32, #tpu.memory_space<vmem>>, vector<2x16xi32>
    %2 = arith.sitofp %1 : vector<2x16xi32> to vector<2x16xf32>
    %c0_3 = arith.constant 0 : index
    %c0_4 = arith.constant 0 : index
    %3 = vector.load %arg4[%c0_3, %c0_4] : memref<2x16xi32, #tpu.memory_space<vmem>>, vector<2x16xi32>
    %cst = arith.constant 0.000000e+00 : f32
    %4 = vector.broadcast %cst : f32 to vector<2x16xf32>
    %5 = arith.maximumf %0, %4 : vector<2x16xf32>
    %c8_i32 = arith.constant 8 : i32
    %6 = arith.muli %arg1, %c8_i32 : i32
    %7 = tpu.iota {dimensions = array<i32: 1>} : vector<1x8x1xi32>
    %8 = vector.broadcast %6 : i32 to vector<1x8x1xi32>
    %9 = arith.addi %7, %8 : vector<1x8x1xi32>
    %c1_i32 = arith.constant 1 : i32
    %10 = vector.broadcast %c1_i32 : i32 to vector<1x8x1xi32>
    %11 = arith.addi %9, %10 : vector<1x8x1xi32>
    %12 = vector.shape_cast %3 : vector<2x16xi32> to vector<2x1x16xi32>
    %13 = vector.broadcast %12 : vector<2x1x16xi32> to vector<2x8x16xi32>
    %14 = vector.broadcast %11 : vector<1x8x1xi32> to vector<2x8x16xi32>
    %15 = arith.cmpi eq, %13, %14 : vector<2x8x16xi32>
    %16 = arith.extui %15 : vector<2x8x16xi1> to vector<2x8x16xi32>
    %17 = arith.sitofp %16 : vector<2x8x16xi32> to vector<2x8x16xf32>
    %18 = vector.shape_cast %5 : vector<2x16xf32> to vector<2x1x16xf32>
    %19 = vector.shape_cast %2 : vector<2x16xf32> to vector<2x1x16xf32>
    %20 = tpu.concatenate %18, %19 in 1 : vector<2x1x16xf32>, vector<2x1x16xf32> -> vector<2x2x16xf32>
    "tpu.trace_start"() <{level = 10 : i32, message = "bct,bwt->bcw"}> : () -> ()
    %cst_5 = arith.constant dense<0.000000e+00> : vector<2x2x8xf32>
    %21 = tpu.matmul %20, %17, %cst_5 {dimension_numbers = #tpu.dot_dimension_numbers<[2], [2], [1], [1], [0, 0, 0, 1, 1, 1], [0], [0]>} : vector<2x2x16xf32>, vector<2x8x16xf32>, vector<2x2x8xf32> -> vector<2x2x8xf32>
    "tpu.trace_stop"() : () -> ()
    %22 = vector.extract_strided_slice %21 {offsets = [0, 0, 0], sizes = [2, 1, 8], strides = [1, 1, 1]} : vector<2x2x8xf32> to vector<2x1x8xf32>
    %23 = vector.shape_cast %22 : vector<2x1x8xf32> to vector<2x8xf32>
    %cst_6 = arith.constant 1.000000e+00 : f32
    %24 = vector.broadcast %cst_6 : f32 to vector<2x8xf32>
    %25 = arith.addf %23, %24 : vector<2x8xf32>
    %26 = math.log %25 : vector<2x8xf32>
    %27 = vector.extract_strided_slice %21 {offsets = [0, 1, 0], sizes = [2, 1, 8], strides = [1, 1, 1]} : vector<2x2x8xf32> to vector<2x1x8xf32>
    %28 = vector.shape_cast %27 : vector<2x1x8xf32> to vector<2x8xf32>
    %cst_7 = arith.constant 1.000000e+00 : f32
    %29 = vector.broadcast %cst_7 : f32 to vector<2x8xf32>
    %30 = arith.addf %28, %29 : vector<2x8xf32>
    %31 = math.log %30 : vector<2x8xf32>
    %32 = arith.subf %26, %31 : vector<2x8xf32>
    %33 = arith.mulf %32, %32 : vector<2x8xf32>
    %34 = vector.shape_cast %33 : vector<2x8xf32> to vector<1x2x8xf32>
    %cst_8 = arith.constant dense<0.000000e+00> : vector<1xf32>
    %35 = vector.multi_reduction <add>, %34, %cst_8 [1, 2] : vector<1x2x8xf32> to vector<1xf32>
    %36 = vector.shape_cast %35 : vector<1xf32> to vector<1x1x1xf32>
    %37 = vector.extract %36[0, 0, 0] : f32 from vector<1x1x1xf32>
    %38 = vector.broadcast %37 : f32 to vector<1x1xf32>
    %cst_9 = arith.constant 0.000000e+00 : f32
    %39 = vector.broadcast %cst_9 : f32 to vector<1x1xf32>
    %40 = tpu.concatenate %39, %38, %39, %39 in 1 : vector<1x1xf32>, vector<1x1xf32>, vector<1x1xf32>, vector<1x1xf32> -> vector<1x4xf32>
    %41 = vector.shape_cast %40 : vector<1x4xf32> to vector<1x1x1x4xf32>
    %c0_10 = arith.constant 0 : index
    %c0_11 = arith.constant 0 : index
    %c0_12 = arith.constant 0 : index
    %c0_13 = arith.constant 0 : index
    %42 = vector.load %arg5[%c0_10, %c0_11, %c0_12, %c0_13] : memref<1x1x1x4xf32, #tpu.memory_space<vmem>>, vector<1x1x1x4xf32>
    tpu.vector_store %arg5[%c0_10, %c0_11, %c0_12, %c0_13], %41 {strides = array<i32>} : memref<1x1x1x4xf32, #tpu.memory_space<vmem>>, vector<1x1x1x4xf32>,
    %c0_i32 = arith.constant 0 : i32
    %43 = arith.cmpi eq, %arg1, %c0_i32 : i32
    %44 = arith.extui %43 : i1 to i32
    %c0_i32_14 = arith.constant 0 : i32
    %45 = arith.cmpi ne, %44, %c0_i32_14 : i32
    scf.if %45 {
      %cst_15 = arith.constant 1.000000e+00 : f32
      %46 = vector.broadcast %cst_15 : f32 to vector<2x16xf32>
      %47 = arith.addf %0, %46 : vector<2x16xf32>
      %48 = math.log %47 : vector<2x16xf32>
      %cst_16 = arith.constant 1.000000e+00 : f32
      %49 = vector.broadcast %cst_16 : f32 to vector<2x16xf32>
      %50 = arith.addf %2, %49 : vector<2x16xf32>
      %51 = math.log %50 : vector<2x16xf32>
      %52 = arith.subf %48, %51 : vector<2x16xf32>
      %53 = arith.mulf %52, %52 : vector<2x16xf32>
      %54 = vector.shape_cast %53 : vector<2x16xf32> to vector<1x2x16xf32>
      %cst_17 = arith.constant dense<0.000000e+00> : vector<1xf32>
      %55 = vector.multi_reduction <add>, %54, %cst_17 [1, 2] : vector<1x2x16xf32> to vector<1xf32>
      %56 = vector.shape_cast %55 : vector<1xf32> to vector<1x1x1xf32>
      %57 = vector.extract %56[0, 0, 0] : f32 from vector<1x1x1xf32>
      %58 = vector.broadcast %57 : f32 to vector<1x1xf32>
      %cst_18 = arith.constant dense<0.000000e+00> : vector<2xf32>
      %59 = vector.multi_reduction <add>, %5, %cst_18 [1] : vector<2x16xf32> to vector<2xf32>
      %60 = vector.shape_cast %59 : vector<2xf32> to vector<2x1xf32>
      %cst_19 = arith.constant dense<0.000000e+00> : vector<2xf32>
      %61 = vector.multi_reduction <add>, %2, %cst_19 [1] : vector<2x16xf32> to vector<2xf32>
      %62 = vector.shape_cast %61 : vector<2xf32> to vector<2x1xf32>
      %cst_20 = arith.constant 1.000000e+00 : f32
      %63 = vector.broadcast %cst_20 : f32 to vector<2x1xf32>
      %64 = arith.addf %60, %63 : vector<2x1xf32>
      %65 = math.log %64 : vector<2x1xf32>
      %cst_21 = arith.constant 1.000000e+00 : f32
      %66 = vector.broadcast %cst_21 : f32 to vector<2x1xf32>
      %67 = arith.addf %62, %66 : vector<2x1xf32>
      %68 = math.log %67 : vector<2x1xf32>
      %69 = arith.subf %65, %68 : vector<2x1xf32>
      %70 = arith.mulf %69, %69 : vector<2x1xf32>
      %71 = vector.shape_cast %70 : vector<2x1xf32> to vector<1x2x1xf32>
      %cst_22 = arith.constant dense<0.000000e+00> : vector<1xf32>
      %72 = vector.multi_reduction <add>, %71, %cst_22 [1, 2] : vector<1x2x1xf32> to vector<1xf32>
      %73 = vector.shape_cast %72 : vector<1xf32> to vector<1x1x1xf32>
      %74 = vector.extract %73[0, 0, 0] : f32 from vector<1x1x1xf32>
      %75 = vector.broadcast %74 : f32 to vector<1x1xf32>
      %76 = vector.shape_cast %3 : vector<2x16xi32> to vector<1x2x16xi32>
      %cst_23 = arith.constant dense<-2147483648> : vector<1xi32>
      %77 = vector.multi_reduction <maxsi>, %76, %cst_23 [1, 2] : vector<1x2x16xi32> to vector<1xi32>
      %78 = vector.shape_cast %77 : vector<1xi32> to vector<1x1x1xi32>
      %79 = vector.extract %78[0, 0, 0] : i32 from vector<1x1x1xi32>
      %80 = vector.broadcast %79 : i32 to vector<1x1xi32>
      %81 = arith.sitofp %80 : vector<1x1xi32> to vector<1x1xf32>
      %82 = tpu.concatenate %58, %38, %75, %81 in 1 : vector<1x1xf32>, vector<1x1xf32>, vector<1x1xf32>, vector<1x1xf32> -> vector<1x4xf32>
      %83 = vector.shape_cast %82 : vector<1x4xf32> to vector<1x1x1x4xf32>
      %c0_24 = arith.constant 0 : index
      %c0_25 = arith.constant 0 : index
      %c0_26 = arith.constant 0 : index
      %c0_27 = arith.constant 0 : index
      %84 = vector.load %arg5[%c0_24, %c0_25, %c0_26, %c0_27] : memref<1x1x1x4xf32, #tpu.memory_space<vmem>>, vector<1x1x1x4xf32>
      tpu.vector_store %arg5[%c0_24, %c0_25, %c0_26, %c0_27], %83 {strides = array<i32>} : memref<1x1x1x4xf32, #tpu.memory_space<vmem>>, vector<1x1x1x4xf32>,
    } else {
    }
    return
  }
  func.func @transform_0(%arg0: i32, %arg1: i32) -> (i32, i32) {
    %c0_i32 = arith.constant 0 : i32
    %c0_i32_0 = arith.constant 0 : i32
    return %arg0, %c0_i32 : i32, i32
  }
  func.func @transform_1(%arg0: i32, %arg1: i32) -> (i32, i32) {
    %c0_i32 = arith.constant 0 : i32
    %c0_i32_0 = arith.constant 0 : i32
    return %arg0, %c0_i32 : i32, i32
  }
  func.func @transform_2(%arg0: i32, %arg1: i32) -> (i32, i32) {
    %c0_i32 = arith.constant 0 : i32
    %c0_i32_0 = arith.constant 0 : i32
    return %arg0, %c0_i32 : i32, i32
  }
  func.func @transform_3(%arg0: i32, %arg1: i32) -> (i32, i32, i32, i32) {
    %c0_i32 = arith.constant 0 : i32
    %c0_i32_0 = arith.constant 0 : i32
    %c0_i32_1 = arith.constant 0 : i32
    return %arg0, %arg1, %c0_i32, %c0_i32_0 : i32, i32, i32, i32
  }
}

</mosaic_0001>

<llo_original>
// kernel: tpu_custom_call.1
$region0: #{tpu_custom_call.1}
  #allocation0 [shape = 'u32[]', space=smem, size = 0x4, offset = 0x4, fixed_abs, tag = 'smem constant byte address 0x4 - core index']
  #allocation1 [shape = 'u32[144,128]{1,0:T(1,128)}', space=vmem, size = 0x12000, scoped, tag = 'internal scratch']
  %s0 = inlined_call_operand.hbm [shape: f32[2,16], index: 0, kind: input, shape index: {}]
  %s1 = inlined_call_operand.vmem [shape: s32[2,16], index: 1, kind: input, shape index: {}]
  %s2 = inlined_call_operand.vmem [shape: s32[2,16], index: 2, kind: input, shape index: {}]
  %s3 = inlined_call_operand.hbm [shape: f32[1,2,1,4], index: 3, kind: output, shape index: {}]
  %s4 = sld [smem:[#allocation0]]
  $region53: #{tpu_custom_call.1} parent=0
    _
  %s6 = ssub.s32 1, %s4
  %s7 = scalar_select 0, %s6, %s4
  $region1: #{tpu_custom_call.1} parent=0
    #allocation2 [shape = 'u8[1024]{0}', space=vmem, size = 0x400, scoped, tag = 'input window, operand 0, single buffered']
    #allocation3 [shape = 's32[2]{0}', space=sflag, size = 0x8, scoped, tag = 'scoped memory for tpu_custom_call.1']
    #allocation4 [shape = 's32[2]{0}', space=sflag, size = 0x8, scoped, tag = 'scoped memory for tpu_custom_call.1']
    #allocation5 [shape = 'u8[1024]{0}', space=vmem, size = 0x400, scoped, tag = 'output window, operand 0']
    %8 = vsyncpa [#allocation3], 0
    %9 = vsyncpa [#allocation4], 0
    %s10 = scalar_lea.sflag [#allocation4], 1
    %11 = vsyncpa %s10, 0
    loop: start=0, step=1, limit=4
    $region2: #{tpu_custom_call.1} parent=1 // loop_pre_header
      _
    $region3: #{tpu_custom_call.1} parent=1 // loop_header
      %s13 = sphi 0, %s17
      %p14 = scmp.ge.s32.totalorder %s13, 4
      %s20 = sphi 0, %s32
      %s21 = sphi 0, %s28
      %s22 = sphi 0, %s20
      %s23 = sphi 0, %s21
      %s24 = sphi 0, %s22
      %s25 = sphi 0, %s23
      %s35 = sphi 0, %s37
      %s38 = sphi 0, %s35
      %s39 = sphi 0, %s38
      %s55 = sphi 0, %s39
      %s61 = sphi 0, %s63
      %s64 = sphi 0, %s61
      %s65 = sphi 0, %s64
      %s81 = sphi 0, %s65
      %s87 = sphi 0, %s89
      %s90 = sphi 0, %s87
      %s91 = sphi 0, %s90
      %s107 = sphi 0, %s91
      %s115 = sphi 0, %s117
      %s118 = sphi 0, %s115
      %s119 = sphi 0, %s118
      %s135 = sphi 0, %s119
    $region4: #{tpu_custom_call.1} parent=1 // loop_header_branch
      %16 = sbr.rel (%p14) target = $region8
    $region5: #{tpu_custom_call.1} parent=1 // loop_body
      %s18 = ssub.s32 %s13, 1
      %s19 = ssub.s32 %s13, 2
      %s26 = sadd.s32 1, %s21
      %p27 = scmp.ge.s32.totalorder %s26, 2
      %s28 = scalar_select %p27, 0, %s26
      %s29 = sadd.s32 1, %s20
      %s30 = scalar_select %p27, %s29, %s20
      %p31 = scmp.ge.s32.totalorder %s30, 1
      %s32 = scalar_select %p31, 0, %s30
      %s33 = ssub.s32 %s20, %s32
      %p34 = scmp.eq.s32.totalorder %s33, 0
      %s36 = sadd.s32 %s35, 1
      %s37 = scalar_select %p34, %s35, %s36
      %p40 = pneg %p34
      %p41 = scmp.eq.s32.totalorder %s13, 1
      %p42 = por %p40, %p41
      %p43 = scmp.ne.s32.totalorder %s35, %s38
      %p44 = scmp.eq.s32.totalorder %s13, 0
      %p45 = por %p43, %p44
      %p46 = scmp.ne.s32.totalorder %s35, %s38
      %p47 = scmp.eq.s32.totalorder %s18, 1
      %p48 = por %p46, %p47
      %p49 = scmp.ne.s32.totalorder %s38, %s39
      %p50 = scmp.eq.s32.totalorder %s18, 0
      %p51 = por %p49, %p50
      %p52 = scmp.ne.s32.totalorder %s38, %s39
      %p53 = scmp.eq.s32.totalorder %s19, 1
      %p54 = por %p52, %p53
      %p56 = scmp.ne.s32.totalorder %s39, %s55
      %p57 = scmp.eq.s32.totalorder %s19, 0
      %p58 = por %p56, %p57
      %s59 = ssub.s32 %s20, %s32
      %p60 = scmp.eq.s32.totalorder %s59, 0
      %s62 = sadd.s32 %s61, 1
      %s63 = scalar_select %p60, %s61, %s62
      %p66 = pneg %p60
      %p67 = scmp.eq.s32.totalorder %s13, 1
      %p68 = por %p66, %p67
      %p69 = scmp.ne.s32.totalorder %s61, %s64
      %p70 = scmp.eq.s32.totalorder %s13, 0
      %p71 = por %p69, %p70
      %p72 = scmp.ne.s32.totalorder %s61, %s64
      %p73 = scmp.eq.s32.totalorder %s18, 1
      %p74 = por %p72, %p73
      %p75 = scmp.ne.s32.totalorder %s64, %s65
      %p76 = scmp.eq.s32.totalorder %s18, 0
      %p77 = por %p75, %p76
      %p78 = scmp.ne.s32.totalorder %s64, %s65
      %p79 = scmp.eq.s32.totalorder %s19, 1
      %p80 = por %p78, %p79
      %p82 = scmp.ne.s32.totalorder %s65, %s81
      %p83 = scmp.eq.s32.totalorder %s19, 0
      %p84 = por %p82, %p83
      %s85 = ssub.s32 %s20, %s32
      %p86 = scmp.eq.s32.totalorder %s85, 0
      %s88 = sadd.s32 %s87, 1
      %s89 = scalar_select %p86, %s87, %s88
      %p92 = pneg %p86
      %p93 = scmp.eq.s32.totalorder %s13, 1
      %p94 = por %p92, %p93
      %p95 = scmp.ne.s32.totalorder %s87, %s90
      %p96 = scmp.eq.s32.totalorder %s13, 0
      %p97 = por %p95, %p96
      %p98 = scmp.ne.s32.totalorder %s87, %s90
      %p99 = scmp.eq.s32.totalorder %s18, 1
      %p100 = por %p98, %p99
      %p101 = scmp.ne.s32.totalorder %s90, %s91
      %p102 = scmp.eq.s32.totalorder %s18, 0
      %p103 = por %p101, %p102
      %p104 = scmp.ne.s32.totalorder %s90, %s91
      %p105 = scmp.eq.s32.totalorder %s19, 1
      %p106 = por %p104, %p105
      %p108 = scmp.ne.s32.totalorder %s91, %s107
      %p109 = scmp.eq.s32.totalorder %s19, 0
      %p110 = por %p108, %p109
      %s111 = ssub.s32 %s20, %s32
      %s112 = ssub.s32 %s21, %s28
      %s113 = sor.u32 %s111, %s112
      %p114 = scmp.eq.s32.totalorder %s113, 0
      %s116 = sadd.s32 %s115, 1
      %s117 = scalar_select %p114, %s115, %s116
      %p120 = pneg %p114
      %p121 = scmp.eq.s32.totalorder %s13, 1
      %p122 = por %p120, %p121
      %p123 = scmp.ne.s32.totalorder %s115, %s118
      %p124 = scmp.eq.s32.totalorder %s13, 0
      %p125 = por %p123, %p124
      %p126 = scmp.ne.s32.totalorder %s115, %s118
      %p127 = scmp.eq.s32.totalorder %s18, 1
      %p128 = por %p126, %p127
      %p129 = scmp.ne.s32.totalorder %s118, %s119
      %p130 = scmp.eq.s32.totalorder %s18, 0
      %p131 = por %p129, %p130
      %p132 = scmp.ne.s32.totalorder %s118, %s119
      %p133 = scmp.eq.s32.totalorder %s19, 1
      %p134 = por %p132, %p133
      %p136 = scmp.ne.s32.totalorder %s119, %s135
      %p137 = scmp.eq.s32.totalorder %s19, 0
      %p138 = por %p136, %p137
      %p139 = scmp.le.s32.totalorder 1, %s13
      %p140 = scmp.lt.s32.totalorder %s13, 3
      %p141 = pnand %p139, %p140
      %p142 = pneg %p141
      // Predicated region
      $region9: #{tpu_custom_call.1} parent=5 // pred_check
        _
      $region10: #{tpu_custom_call.1} parent=5 // pred_check_branch
        %144 = sbr.rel (%p141) target = $region12
      $region11: #{tpu_custom_call.1} parent=5 // pred_region
        %s145 = ssub.s32 %s13, 1
        // Predicated region
        $region13: #{tpu_custom_call.1} parent=11 // pred_check
          %p146 = pneg %p51
        $region14: #{tpu_custom_call.1} parent=11 // pred_check_branch
          %148 = sbr.rel (%p146) target = $region16
        $region15: #{tpu_custom_call.1} parent=11 // pred_region
          %s150 = ssub.s32 32, 32
          %151 = vsyncadd [#allocation3], %s150
          %s152 = smul.addr %s22, 32
          %s153 = scalar_lea.hbm %s0, %s152
          %s155 = sshll.u32 [#allocation2], 4
          %s156 = int_to_ptr.vmem [resolvable:$true] %s155
          %158 = dma.hbm_to_vmem [thread:$0]  %s153, 32, %s156, [#allocation3]
        $region16: #{tpu_custom_call.1} parent=11 // pred_fallthru
          _
        // Predicated region
        $region17: #{tpu_custom_call.1} parent=11 // pred_check
          %p159 = pneg %p77
        $region18: #{tpu_custom_call.1} parent=11 // pred_check_branch
          %161 = sbr.rel (%p159) target = $region20
        $region19: #{tpu_custom_call.1} parent=11 // pred_region
          %p162 = scmp.lt.s32.totalorder %s22, 0
          %s163 = scalar_select %p162, %s22, 0
          %s164 = smul.addr %s163, 2
          %s165 = scalar_lea.vmem %s1, %s164
        $region20: #{tpu_custom_call.1} parent=11 // pred_fallthru
          _
        // Predicated region
        $region21: #{tpu_custom_call.1} parent=11 // pred_check
          %p166 = pneg %p103
        $region22: #{tpu_custom_call.1} parent=11 // pred_check_branch
          %168 = sbr.rel (%p166) target = $region24
        $region23: #{tpu_custom_call.1} parent=11 // pred_region
          %p169 = scmp.lt.s32.totalorder %s22, 0
          %s170 = scalar_select %p169, %s22, 0
          %s171 = smul.addr %s170, 2
          %s172 = scalar_lea.vmem %s2, %s171
        $region24: #{tpu_custom_call.1} parent=11 // pred_fallthru
          _
      $region12: #{tpu_custom_call.1} parent=5 // pred_fallthru
        _
      %p173 = scmp.lt.s32.totalorder %s13, 2
      // Predicated region
      $region25: #{tpu_custom_call.1} parent=5 // pred_check
        %p174 = pneg %p173
      $region26: #{tpu_custom_call.1} parent=5 // pred_check_branch
        %176 = sbr.rel (%p174) target = $region28
      $region27: #{tpu_custom_call.1} parent=5 // pred_region
        _
      $region28: #{tpu_custom_call.1} parent=5 // pred_fallthru
        _
      %p177 = scmp.le.s32.totalorder 1, %s13
      %p178 = scmp.lt.s32.totalorder %s13, 3
      %p179 = pnand %p177, %p178
      %p180 = pneg %p179
      // Predicated region
      $region29: #{tpu_custom_call.1} parent=5 // pred_check
        _
      $region30: #{tpu_custom_call.1} parent=5 // pred_check_branch
        %182 = sbr.rel (%p179) target = $region32
      $region31: #{tpu_custom_call.1} parent=5 // pred_region
        %s183 = ssub.s32 %s13, 1
        // Predicated region
        $region33: #{tpu_custom_call.1} parent=31 // pred_check
          %p184 = pneg %p51
        $region34: #{tpu_custom_call.1} parent=31 // pred_check_branch
          %186 = sbr.rel (%p184) target = $region36
        $region35: #{tpu_custom_call.1} parent=31 // pred_region
          %187 = dma.done [#allocation3], 32
        $region36: #{tpu_custom_call.1} parent=31 // pred_fallthru
          _
        %p188 = pneg %p51
        %p189 = pneg %p48
        %p190 = scmp.lt.s32.totalorder %s22, 0
        %s191 = scalar_select %p190, %s22, 0
        %s192 = smul.addr %s191, 2
        %s193 = scalar_lea.vmem %s1, %s192
        %p194 = pneg %p77
        %p195 = pneg %p74
        %p196 = scmp.lt.s32.totalorder %s22, 0
        %s197 = scalar_select %p196, %s22, 0
        %s198 = smul.addr %s197, 2
        %s199 = scalar_lea.vmem %s2, %s198
        %p200 = pneg %p103
        %p201 = pneg %p100
        %p202 = pneg %p131
        %p203 = pneg %p128
        %s204 = sand.u32 %s118, 1
        %s205 = scalar_lea.sflag [#allocation4], %s204
        %s206 = sand.u32 %s118, 1
        %s207 = scalar_lea.vmem [#allocation5], %s206
        %p208 = scmp.lt.s32.totalorder %s22, 0
        %s209 = scalar_select %p208, %s22, 0
        %s210 = smul.addr %s209, 2
        %s211 = scalar_lea.vmem %s1, %s210
        %p212 = scmp.lt.s32.totalorder %s22, 0
        %s213 = scalar_select %p212, %s22, 0
        %s214 = smul.addr %s213, 2
        %s215 = scalar_lea.vmem %s2, %s214
        %v216 = vld [vmem:[#allocation2] sm:$0x3]
        %v217 = vld [vmem:[%s211] sm:$0x3]
        %v218 = vcvt.s32.f32 %v217
        %v219 = vld [vmem:[%s215] sm:$0x3]
        %v220 = vmax.f32 %v216, 0.0
        %s221 = smul.u32 %s23, 8
        %v222 = vlaneseq
        %v223 = vshrl.u32 %v222, 7
        %v224 = vstv %s221
        %v225 = vadd.s32 %v223, %v224
        %v226 = vadd.s32 %v225, 1
        %v228 = vunpack.c.l.s4 1966171168
        %v229 = vunpack.c.0.s8 %v228
        %v230 = vlaneseq
        %v231 = vshrl.u32 %v230, 7
        %v232 = vsub.s32 %v229, %v231
        %v233 = vrot.slane %v219, %v232
        %v234 = vcombine.high %v233, %v233
        %v236 = vunpack.c.l.s4 1966171168
        %v237 = vunpack.c.0.s8 %v236
        %v238 = vlaneseq
        %v239 = vshrl.u32 %v238, 7
        %v240 = vsub.s32 %v237, %v239
        %v241 = vrot.slane %v233, %v240
        %v243 = vunpack.c.l.s4 1966171168
        %v244 = vunpack.c.0.s8 %v243
        %v245 = vlaneseq
        %v246 = vshrl.u32 %v245, 7
        %v247 = vsub.s32 %v244, %v246
        %v248 = vrot.slane %v234, %v247
        %v249 = vlaneseq
        %v250 = vshrl.u32 %v249, 7
        %v251 = vsub.s32 0, %v250
        %v252 = vrot.slane %v241, %v251
        %v253 = vlaneseq
        %v254 = vshrl.u32 %v253, 7
        %v255 = vsub.s32 0, %v254
        %v256 = vrot.slane %v248, %v255
        %vm257 = vcmp.eq.s32.totalorder %v252, %v226
        %vm258 = vcmp.eq.s32.totalorder %v256, %v226
        %v259 = vsel %vm257, 1, 0
        %v260 = vsel %vm258, 1, 0
        %v261 = vcvt.s32.f32 %v259
        %v262 = vcvt.s32.f32 %v260
        %v265 = vunpack.c.l.s4 1966171168
        %v266 = vunpack.c.0.s8 %v265
        %v267 = vlaneseq
        %v268 = vshrl.u32 %v267, 7
        %v269 = vsub.s32 %v266, %v268
        %v270 = vrot.slane %v220, %v269
        %v271 = vcombine.high %v270, %v270
        %v273 = vunpack.c.l.s4 1966171168
        %v274 = vunpack.c.0.s8 %v273
        %v275 = vlaneseq
        %v276 = vshrl.u32 %v275, 7
        %v277 = vsub.s32 %v274, %v276
        %v278 = vrot.slane %v270, %v277
        %v280 = vunpack.c.l.s4 1966171168
        %v281 = vunpack.c.0.s8 %v280
        %v282 = vlaneseq
        %v283 = vshrl.u32 %v282, 7
        %v284 = vsub.s32 %v281, %v283
        %v285 = vrot.slane %v271, %v284
        %v290 = vunpack.c.l.s4 1966171168
        %v291 = vunpack.c.0.s8 %v290
        %v292 = vlaneseq
        %v293 = vshrl.u32 %v292, 7
        %v294 = vsub.s32 %v291, %v293
        %v295 = vrot.slane %v218, %v294
        %v296 = vcombine.high %v295, %v295
        %v298 = vunpack.c.l.s4 1966171168
        %v299 = vunpack.c.0.s8 %v298
        %v300 = vlaneseq
        %v301 = vshrl.u32 %v300, 7
        %v302 = vsub.s32 %v299, %v301
        %v303 = vrot.slane %v295, %v302
        %v305 = vunpack.c.l.s4 1966171168
        %v306 = vunpack.c.0.s8 %v305
        %v307 = vlaneseq
        %v308 = vshrl.u32 %v307, 7
        %v309 = vsub.s32 %v306, %v308
        %v310 = vrot.slane %v296, %v309
        %v311 = vlaneseq
        %v312 = vshrl.u32 %v311, 7
        %v313 = vsub.s32 0, %v312
        %v314 = vrot.slane %v303, %v313
        %v315 = vlaneseq
        %v316 = vshrl.u32 %v315, 7
        %v317 = vsub.s32 0, %v316
        %v318 = vrot.slane %v310, %v317
        %vm321 = vcmask 1040384
        %v322 = vsel %vm321, %v278, %v314
        %v323 = vsel %vm321, %v285, %v318
        %vm324 = vcmask 130048
        %v326 = vsel %vm324, %v322, 0
        %v329 = vsel %vm324, %v261, 0
        %331 = vmatprep.subr.mxu0 0.0
        %332 = vmatpush1.xpose.msra.mxu0 %v329
        %333 = vmatprep.subr.mxu0 0.0
        %334 = vmatpush1.xpose.msra.mxu0 0.0
        %335 = vmatprep.subr.mxu0 0.0
        %336 = vmatpush1.xpose.msra.mxu0 0.0
        %337 = vmatprep.subr.mxu0 0.0
        %338 = vmatpush1.xpose.msra.mxu0 0.0
        %339 = vmatprep.subr.mxu0 0.0
        %340 = vmatpush1.xpose.msra.mxu0 0.0
        %341 = vmatprep.subr.mxu0 0.0
        %342 = vmatpush1.xpose.msra.mxu0 0.0
        %343 = vmatprep.subr.mxu0 0.0
        %344 = vmatpush1.xpose.msra.mxu0 0.0
        %345 = vmatprep.subr.mxu0 0.0
        %346 = vmatpush1.xpose.msra.mxu0 0.0
        %347 = vmatprep.subr.mxu0 0.0
        %348 = vmatpush1.xpose.msra.mxu0 0.0
        %349 = vmatprep.subr.mxu0 0.0
        %350 = vmatpush1.xpose.msra.mxu0 0.0
        %351 = vmatprep.subr.mxu0 0.0
        %352 = vmatpush1.xpose.msra.mxu0 0.0
        %353 = vmatprep.subr.mxu0 0.0
        %354 = vmatpush1.xpose.msra.mxu0 0.0
        %355 = vmatprep.subr.mxu0 0.0
        %356 = vmatpush1.xpose.msra.mxu0 0.0
        %357 = vmatprep.subr.mxu0 0.0
        %358 = vmatpush1.xpose.msra.mxu0 0.0
        %359 = vmatprep.subr.mxu0 0.0
        %360 = vmatpush1.xpose.msra.mxu0 0.0
        %361 = vmatprep.subr.mxu0 0.0
        %362 = vmatpush1.xpose.msra.mxu0 0.0
        %363 = vmatprep.subr.mxu0 0.0
        %364 = vmatpush1.xpose.msra.mxu0 0.0
        %365 = vmatprep.subr.mxu0 0.0
        %366 = vmatpush1.xpose.msra.mxu0 0.0
        %367 = vmatprep.subr.mxu0 0.0
        %368 = vmatpush1.xpose.msra.mxu0 0.0
        %369 = vmatprep.subr.mxu0 0.0
        %370 = vmatpush1.xpose.msra.mxu0 0.0
        %371 = vmatprep.subr.mxu0 0.0
        %372 = vmatpush1.xpose.msra.mxu0 0.0
        %373 = vmatprep.subr.mxu0 0.0
        %374 = vmatpush1.xpose.msra.mxu0 0.0
        %375 = vmatprep.subr.mxu0 0.0
        %376 = vmatpush1.xpose.msra.mxu0 0.0
        %377 = vmatprep.subr.mxu0 0.0
        %378 = vmatpush1.xpose.msra.mxu0 0.0
        %379 = vmatprep.subr.mxu0 0.0
        %380 = vmatpush1.xpose.msra.mxu0 0.0
        %381 = vmatprep.subr.mxu0 0.0
        %382 = vmatpush1.xpose.msra.mxu0 0.0
        %383 = vmatprep.subr.mxu0 0.0
        %384 = vmatpush1.xpose.msra.mxu0 0.0
        %385 = vmatprep.subr.mxu0 0.0
        %386 = vmatpush1.xpose.msra.mxu0 0.0
        %387 = vmatprep.subr.mxu0 0.0
        %388 = vmatpush1.xpose.msra.mxu0 0.0
        %389 = vmatprep.subr.mxu0 0.0
        %390 = vmatpush1.xpose.msra.mxu0 0.0
        %391 = vmatprep.subr.mxu0 0.0
        %392 = vmatpush1.xpose.msra.mxu0 0.0
        %393 = vmatprep.subr.mxu0 0.0
        %394 = vmatpush1.xpose.msra.mxu0 0.0
        %395 = vmatprep.mubr.f32.mxu0 0.0
        %396 = vmatmul.mubr.f32.gmra.mrb[0].mxu0 %v326
        %v397 = vpop.f32.mrb[0].mxu0
        %v398 = vadd.f32 0.0, %v397
        %v399 = vpop.f32.mrb[0].mxu0
        %400 = vdwg.mxu0
        %v402 = vsel %vm324, %v323, 0
        %v405 = vsel %vm324, %v262, 0
        %407 = vmatprep.subr.mxu0 0.0
        %408 = vmatpush1.xpose.msra.mxu0 %v405
        %409 = vmatprep.subr.mxu0 0.0
        %410 = vmatpush1.xpose.msra.mxu0 0.0
        %411 = vmatprep.subr.mxu0 0.0
        %412 = vmatpush1.xpose.msra.mxu0 0.0
        %413 = vmatprep.subr.mxu0 0.0
        %414 = vmatpush1.xpose.msra.mxu0 0.0
        %415 = vmatprep.subr.mxu0 0.0
        %416 = vmatpush1.xpose.msra.mxu0 0.0
        %417 = vmatprep.subr.mxu0 0.0
        %418 = vmatpush1.xpose.msra.mxu0 0.0
        %419 = vmatprep.subr.mxu0 0.0
        %420 = vmatpush1.xpose.msra.mxu0 0.0
        %421 = vmatprep.subr.mxu0 0.0
        %422 = vmatpush1.xpose.msra.mxu0 0.0
        %423 = vmatprep.subr.mxu0 0.0
        %424 = vmatpush1.xpose.msra.mxu0 0.0
        %425 = vmatprep.subr.mxu0 0.0
        %426 = vmatpush1.xpose.msra.mxu0 0.0
        %427 = vmatprep.subr.mxu0 0.0
        %428 = vmatpush1.xpose.msra.mxu0 0.0
        %429 = vmatprep.subr.mxu0 0.0
        %430 = vmatpush1.xpose.msra.mxu0 0.0
        %431 = vmatprep.subr.mxu0 0.0
        %432 = vmatpush1.xpose.msra.mxu0 0.0
        %433 = vmatprep.subr.mxu0 0.0
        %434 = vmatpush1.xpose.msra.mxu0 0.0
        %435 = vmatprep.subr.mxu0 0.0
        %436 = vmatpush1.xpose.msra.mxu0 0.0
        %437 = vmatprep.subr.mxu0 0.0
        %438 = vmatpush1.xpose.msra.mxu0 0.0
        %439 = vmatprep.subr.mxu0 0.0
        %440 = vmatpush1.xpose.msra.mxu0 0.0
        %441 = vmatprep.subr.mxu0 0.0
        %442 = vmatpush1.xpose.msra.mxu0 0.0
        %443 = vmatprep.subr.mxu0 0.0
        %444 = vmatpush1.xpose.msra.mxu0 0.0
        %445 = vmatprep.subr.mxu0 0.0
        %446 = vmatpush1.xpose.msra.mxu0 0.0
        %447 = vmatprep.subr.mxu0 0.0
        %448 = vmatpush1.xpose.msra.mxu0 0.0
        %449 = vmatprep.subr.mxu0 0.0
        %450 = vmatpush1.xpose.msra.mxu0 0.0
        %451 = vmatprep.subr.mxu0 0.0
        %452 = vmatpush1.xpose.msra.mxu0 0.0
        %453 = vmatprep.subr.mxu0 0.0
        %454 = vmatpush1.xpose.msra.mxu0 0.0
        %455 = vmatprep.subr.mxu0 0.0
        %456 = vmatpush1.xpose.msra.mxu0 0.0
        %457 = vmatprep.subr.mxu0 0.0
        %458 = vmatpush1.xpose.msra.mxu0 0.0
        %459 = vmatprep.subr.mxu0 0.0
        %460 = vmatpush1.xpose.msra.mxu0 0.0
        %461 = vmatprep.subr.mxu0 0.0
        %462 = vmatpush1.xpose.msra.mxu0 0.0
        %463 = vmatprep.subr.mxu0 0.0
        %464 = vmatpush1.xpose.msra.mxu0 0.0
        %465 = vmatprep.subr.mxu0 0.0
        %466 = vmatpush1.xpose.msra.mxu0 0.0
        %467 = vmatprep.subr.mxu0 0.0
        %468 = vmatpush1.xpose.msra.mxu0 0.0
        %469 = vmatprep.subr.mxu0 0.0
        %470 = vmatpush1.xpose.msra.mxu0 0.0
        %471 = vmatprep.mubr.f32.mxu0 0.0
        %472 = vmatmul.mubr.f32.gmra.mrb[0].mxu0 %v402
        %v473 = vpop.f32.mrb[0].mxu0
        %v474 = vadd.f32 0.0, %v473
        %v475 = vpop.f32.mrb[0].mxu0
        %476 = vdwg.mxu0
        %v477 = vadd.f32 %v398, 1.0
        %v478 = vadd.f32 %v474, 1.0
        %v479 = vlog2.pop %v477
        %v480 = vmul.f32 %v479, 0.6931472
        %v481 = vlog2.pop %v478
        %v482 = vmul.f32 %v481, 0.6931472
        %v485 = vrot.slane %v480, 1
        %v486 = vrot.slane %v482, 1
        %v489 = vsub.f32 %v480, %v485
        %v490 = vsub.f32 %v482, %v486
        %v491 = vmul.f32 %v489, %v489
        %v492 = vmul.f32 %v490, %v490
        %v495 = vrot.slane %v492, 7
        %vm496 = vcmask 1041409
        %v497 = vsel %vm496, %v495, %v491
        %vm499 = vcmask 58368
        %v500 = vsel %vm499, %v497, 0.0
        %501 = vadd.xlane.f32.xlu0 %v500
        %v502 = vpop.xlane.xlu0 %501
        %v503 = vrot.slane %v502, 4
        %v504 = vadd.f32 %v502, %v503
        %v505 = vrot.slane %v504, 2
        %v506 = vadd.f32 %v504, %v505
        %v507 = vrot.slane %v506, 1
        %v508 = vadd.f32 %v506, %v507
        %s509 = vtos %v508
        %v510 = vstv %s509
        %vm511 = vcmask 7168
        %v512 = vsel %vm511, 0.0, %v510
        %vm513 = vcmask 15360
        %v514 = vsel %vm513, %v512, 0.0
        %vm515 = vcmask 23552
        %v516 = vsel %vm515, %v514, 0.0
        %vm517 = vcmask 24576
        %518 = vst.msk [vmem:[%s207] sm:$0x1] %vm517, %v516
        %p519 = scmp.eq.s32.totalorder %s23, 0
        // Predicated region
        $region37: #{tpu_custom_call.1} parent=31 // pred_check
          %p520 = pneg %p519
        $region38: #{tpu_custom_call.1} parent=31 // pred_check_branch
          %522 = sbr.rel (%p520) target = $region40
        $region39: #{tpu_custom_call.1} parent=31 // pred_region
          %v523 = vadd.f32 %v216, 1.0
          %v524 = vlog2.pop %v523
          %v525 = vmul.f32 %v524, 0.6931472
          %v526 = vadd.f32 %v218, 1.0
          %v527 = vlog2.pop %v526
          %v528 = vmul.f32 %v527, 0.6931472
          %v529 = vsub.f32 %v525, %v528
          %v530 = vmul.f32 %v529, %v529
          %vm531 = vcmask 123904
          %v532 = vsel %vm531, %v530, 0.0
          %533 = vadd.xlane.f32.xlu0 %v532
          %v534 = vpop.xlane.xlu0 %533
          %v535 = vrot.slane %v534, 4
          %v536 = vadd.f32 %v534, %v535
          %v537 = vrot.slane %v536, 2
          %v538 = vadd.f32 %v536, %v537
          %v539 = vrot.slane %v538, 1
          %v540 = vadd.f32 %v538, %v539
          %s541 = vtos %v540
          %v542 = vstv %s541
          %v543 = vsel %vm531, %v220, 0.0
          %544 = vadd.xlane.f32.xlu0 %v543
          %v545 = vpop.xlane.xlu0 %544
          %v546 = vsel %vm531, %v218, 0.0
          %547 = vadd.xlane.f32.xlu0 %v546
          %v548 = vpop.xlane.xlu0 %547
          %v549 = vadd.f32 %v545, 1.0
          %v550 = vlog2.pop %v549
          %v551 = vmul.f32 %v550, 0.6931472
          %v552 = vadd.f32 %v548, 1.0
          %v553 = vlog2.pop %v552
          %v554 = vmul.f32 %v553, 0.6931472
          %v555 = vsub.f32 %v551, %v554
          %v556 = vmul.f32 %v555, %v555
          %vm557 = vcmask 1024
          %v558 = vsel %vm557, %v556, 0.0
          %559 = vadd.xlane.f32.xlu0 %v558
          %v560 = vpop.xlane.xlu0 %559
          %v561 = vrot.slane %v560, 4
          %v562 = vadd.f32 %v560, %v561
          %v563 = vrot.slane %v562, 2
          %v564 = vadd.f32 %v562, %v563
          %v565 = vrot.slane %v564, 1
          %v566 = vadd.f32 %v564, %v565
          %s567 = vtos %v566
          %v568 = vstv %s567
          %v569 = vsel %vm531, %v219, 2147483648
          %v570 = vand.u32 %v569, 65535
          %v571 = vshra.s32 %v569, 16
          %v572 = vcvt.s32.f32 %v570
          %v573 = vcvt.s32.f32 %v571
          %574 = vmax.xlane.f32.xlu0 %v573
          %v575 = vpop.xlane.xlu0 %574
          %vm576 = vcmp.eq.f32.partialorder %v573, %v575
          %v577 = vsel %vm576, %v572, -inf
          %578 = vmax.xlane.f32.xlu0 %v577
          %v579 = vpop.xlane.xlu0 %578
          %v580 = vcvt.f32.s32 %v579
          %v581 = vcvt.f32.s32 %v575
          %v582 = vshll.u32 %v581, 16
          %v583 = vadd.s32 %v582, %v580
          %v584 = vrot.slane %v583, 4
          %vm585 = vcmp.gt.s32.totalorder %v583, %v584
          %v586 = vsel %vm585, %v583, %v584
          %v587 = vrot.slane %v586, 2
          %vm588 = vcmp.gt.s32.totalorder %v586, %v587
          %v589 = vsel %vm588, %v586, %v587
          %v590 = vrot.slane %v589, 1
          %vm591 = vcmp.gt.s32.totalorder %v589, %v590
          %v592 = vsel %vm591, %v589, %v590
          %s593 = vtos %v592
          %v594 = vstv %s593
          %v595 = vcvt.s32.f32 %v594
          %v596 = vsel %vm511, %v542, %v510
          %v597 = vsel %vm513, %v596, %v568
          %v598 = vsel %vm515, %v597, %v595
          %599 = vst.msk [vmem:[%s207] sm:$0x1] %vm517, %v598
        $region40: #{tpu_custom_call.1} parent=31 // pred_fallthru
          _
        %s600 = sand.u32 %s118, 1
        %s601 = scalar_lea.sflag [#allocation4], %s600
        %s602 = sand.u32 %s118, 1
        %s603 = scalar_lea.vmem [#allocation5], %s602
        // Predicated region
        $region41: #{tpu_custom_call.1} parent=31 // pred_check
          %p604 = pneg %p128
        $region42: #{tpu_custom_call.1} parent=31 // pred_check_branch
          %606 = sbr.rel (%p604) target = $region44
        $region43: #{tpu_custom_call.1} parent=31 // pred_region
          %s608 = ssub.s32 16, 16
          %609 = vsyncadd %s601, %s608
          %s610 = smul.addr %s22, 2
          %s611 = sadd.s32 %s23, %s610
          %s612 = smul.addr %s611, 16
          %s613 = scalar_lea.hbm %s3, %s612
          %s615 = sshll.u32 %s603, 4
          %s616 = int_to_ptr.vmem [resolvable:$true] %s615
          %618 = dma.vmem_to_hbm [thread:$0]  %s616, 16, %s613, %s601
        $region44: #{tpu_custom_call.1} parent=31 // pred_fallthru
          _
      $region32: #{tpu_custom_call.1} parent=5 // pred_fallthru
        _
      %p619 = scmp.le.s32.totalorder 2, %s13
      // Predicated region
      $region45: #{tpu_custom_call.1} parent=5 // pred_check
        %p620 = pneg %p619
      $region46: #{tpu_custom_call.1} parent=5 // pred_check_branch
        %622 = sbr.rel (%p620) target = $region48
      $region47: #{tpu_custom_call.1} parent=5 // pred_region
        %s623 = ssub.s32 %s13, 2
        // Predicated region
        $region49: #{tpu_custom_call.1} parent=47 // pred_check
          %p624 = pneg %p134
        $region50: #{tpu_custom_call.1} parent=47 // pred_check_branch
          %626 = sbr.rel (%p624) target = $region52
        $region51: #{tpu_custom_call.1} parent=47 // pred_region
          %s627 = sand.u32 %s119, 1
          %s628 = scalar_lea.sflag [#allocation4], %s627
          %s629 = sand.u32 %s119, 1
          %s630 = scalar_lea.vmem [#allocation5], %s629
          %631 = dma.done %s628, 16
        $region52: #{tpu_custom_call.1} parent=47 // pred_fallthru
          _
      $region48: #{tpu_custom_call.1} parent=5 // pred_fallthru
        _
    $region6: #{tpu_custom_call.1} parent=1 // loop_footer
      %s17 = sadd.s32 1, %s13
    $region7: #{tpu_custom_call.1} parent=1 // loop_footer_branch
      %12 = sbr.rel target = $region3
    $region8: #{tpu_custom_call.1} parent=1 // loop_exit
      _
    %632 = vsyncpa [#allocation3], 1
    %s633 = scalar_lea.sflag [#allocation3], 1
    %634 = vsyncpa %s633, 1
    %635 = vsyncpa [#allocation4], 1
    %s636 = scalar_lea.sflag [#allocation4], 1
    %637 = vsyncpa %s636, 1

</llo_original>
